<compile_context>
chip_gen: v7x
topology: tpu7x:2x2x1
jax: 0.10.0
libtpu: 0.0.40
codegen_flags: <defaults>
</compile_context>

<pallas_src>
import jax
import jax.numpy as jnp
from jax.experimental import pallas as pl
from jax.experimental.pallas import tpu as pltpu


def _encoder_kernel(x_ref, scale_ref, shift_ref, hs_ref, last_ref):
    # Each ResNetEncoderLayer reduces to ReLU (convolution=None, no-op pooling),
    # and ReLU is idempotent, so layer l's output is ReLU(x) for every l.
    # TODO(synk): ResNetEncoderLayer.forward is empty in the reference; the
    # intended convolution/pooling are undefined, so only ReLU is applied.
    y = jnp.maximum(x_ref[...], 0)

    # layer_output.append(x)  ->  hidden_states[l] (this row tile).
    hs_ref[0, :, :] = y

    # last_hidden_state = "layer_norm"(x) -> BatchNorm2d (eval) fused affine.
    # The value is identical for every layer step, so write it unconditionally
    # (correct in any grid order); HBM writeback happens once per row tile.
    yf = y.astype(jnp.float32)
    last_ref[...] = (yf * scale_ref[...] + shift_ref[...]).astype(last_ref.dtype)


def _pick_row_tile(rows, lanes, itemsize, max_tile_rows=None,
                   vmem_budget_bytes=20 * 1024 * 1024):
    """Largest row tile (multiple of 8, dividing `rows`) that fits the VMEM budget.

    Budget per row: double-buffered {x, hs, last} tiles plus the (128-lane
    padded) double-buffered scale/shift column vectors.  Conservative enough
    for v7x's 64 MiB VMEM as well as v5e/v6e.
    """
    lane_pad = max(lanes, 128)                      # VMEM pads lanes to 128
    per_row = 3 * 2 * lane_pad * itemsize + 2 * 2 * 128 * 4
    cap = max(8, vmem_budget_bytes // per_row)
    if max_tile_rows is not None:
        cap = min(cap, max_tile_rows)
    if rows <= cap:
        return rows
    tile = (cap // 8) * 8
    while tile >= 8 and rows % tile != 0:
        tile -= 8
    return tile if tile >= 8 else rows


def resnet_encoder_forward(x, bn_weight, bn_bias, bn_mean, bn_var,
                           *, num_layers, eps, max_tile_rows=None):
    """Returns (last_hidden_state, hidden_states) matching the torch module."""
    B, C, H, W = x.shape
    HW = H * W
    rows = B * C
    out_dtype = x.dtype
    itemsize = jnp.dtype(out_dtype).itemsize

    # Free reshape (no transpose): rows = B*C on sublanes, lanes = H*W.
    x2d = x.reshape(rows, HW)

    # Fuse BatchNorm2d (eval mode) into per-channel scale/shift, tiled per row.
    scale = (bn_weight.astype(jnp.float32)
             / jnp.sqrt(bn_var.astype(jnp.float32) + jnp.float32(eps)))   # (C,)
    shift = bn_bias.astype(jnp.float32) - bn_mean.astype(jnp.float32) * scale
    row_scale = jnp.tile(scale, (B,)).reshape(rows, 1)
    row_shift = jnp.tile(shift, (B,)).reshape(rows, 1)

    tile_rows = _pick_row_tile(rows, HW, itemsize, max_tile_rows=max_tile_rows)
    num_row_tiles = rows // tile_rows

    # Memory-heavy, essentially zero-flop custom call: tell XLA's scheduler.
    cost = pl.CostEstimate(
        flops=3 * (num_layers + 1) * rows * HW,
        transcendentals=0,
        bytes_accessed=(num_layers + 2) * rows * HW * itemsize
        + 2 * rows * 4,
    )

    hs2d, last2d = pl.pallas_call(
        _encoder_kernel,
        out_shape=(
            jax.ShapeDtypeStruct((num_layers, rows, HW), out_dtype),
            jax.ShapeDtypeStruct((rows, HW), out_dtype),
        ),
        # Row tiles outer ("parallel", megacore-shardable); layers inner
        # ("arbitrary") so the x tile is fetched once per row tile and the
        # last_hidden_state tile is written back once per row tile.
        grid=(num_row_tiles, num_layers),
        in_specs=[
            pl.BlockSpec((tile_rows, HW), lambda r, l: (r, 0)),   # x row tile
            pl.BlockSpec((tile_rows, 1), lambda r, l: (r, 0)),    # BN scale
            pl.BlockSpec((tile_rows, 1), lambda r, l: (r, 0)),    # BN shift
        ],
        out_specs=(
            pl.BlockSpec((1, tile_rows, HW), lambda r, l: (l, r, 0)),  # hidden_states
            pl.BlockSpec((tile_rows, HW), lambda r, l: (r, 0)),        # last_hidden_state
        ),
        compiler_params=pltpu.CompilerParams(
            dimension_semantics=("parallel", "arbitrary"),
            vmem_limit_bytes=32 * 1024 * 1024,   # safe on v5e/v6e/v7x physical VMEM
        ),
        cost_estimate=cost,
    )(x2d, row_scale, row_shift)

    last_hidden_state = last2d.reshape(B, C, H, W)
    hidden_states = hs2d.reshape(num_layers, B, C, H, W)
    return last_hidden_state, hidden_states


def _reference(x, bn_weight, bn_bias, bn_mean, bn_var, *, num_layers, eps):
    h = x
    outs = []
    for _ in range(num_layers):
        h = jnp.maximum(h, 0.0)
        outs.append(h)
    scale = bn_weight / jnp.sqrt(bn_var + eps)
    shift = bn_bias - bn_mean * scale
    last = h * scale.reshape(1, -1, 1, 1) + shift.reshape(1, -1, 1, 1)
    return last, jnp.stack(outs, axis=0)


if __name__ == "__main__":
    # Small NCHW shapes consistent with the module (num_features scaled down
    # from 768, num_layers from 12).  H*W = 128 keeps the lane axis dense.
    B, C, H, W = 2, 32, 8, 16
    num_layers = 4
    eps = 0.02                          # batch_norm_eps from __init__

    key = jax.random.PRNGKey(0)
    kx, kw, kb, km, kv = jax.random.split(key, 5)
    x = jax.random.normal(kx, (B, C, H, W), dtype=jnp.float32)

    # Non-trivial BatchNorm2d statistics to exercise the fused affine.
    bn_weight = 1.0 + 0.1 * jax.random.normal(kw, (C,), dtype=jnp.float32)
    bn_bias = 0.1 * jax.random.normal(kb, (C,), dtype=jnp.float32)
    bn_mean = 0.1 * jax.random.normal(km, (C,), dtype=jnp.float32)
    bn_var = jax.random.uniform(kv, (C,), dtype=jnp.float32,
                                minval=0.5, maxval=1.5)

    # max_tile_rows=32 forces num_row_tiles > 1 so the tiled path is exercised.
    last, hidden = resnet_encoder_forward(
        x, bn_weight, bn_bias, bn_mean, bn_var,
        num_layers=num_layers, eps=eps, max_tile_rows=32)
    jax.block_until_ready((last, hidden))

    ref_last, ref_hidden = _reference(
        x, bn_weight, bn_bias, bn_mean, bn_var, num_layers=num_layers, eps=eps)
    assert last.shape == (B, C, H, W)
    assert hidden.shape == (num_layers, B, C, H, W)
    assert jnp.allclose(last, ref_last, atol=1e-5, rtol=1e-5)
    assert jnp.allclose(hidden, ref_hidden, atol=1e-5, rtol=1e-5)

    print("KERNEL_OK")
</pallas_src>

<mosaic_0001>
module attributes {stable_mosaic.version = 11 : i64} {
  func.func @_encoder_kernel(%arg0: i32, %arg1: i32, %arg2: memref<32x128xf32, #tpu.memory_space<vmem>>, %arg3: memref<32x1xf32, #tpu.memory_space<vmem>>, %arg4: memref<32x1xf32, #tpu.memory_space<vmem>>, %arg5: memref<1x32x128xf32, #tpu.memory_space<vmem>>, %arg6: memref<32x128xf32, #tpu.memory_space<vmem>>) attributes {dimension_semantics = [#tpu.dimension_semantics<parallel>, #tpu.dimension_semantics<arbitrary>], iteration_bounds = array<i64: 2, 4>, scalar_prefetch = 0 : i64, scratch_operands = 0 : i64, tpu.core_type = #tpu.core_type<tc>, window_params = [{transform_indices = @transform_0, window_bounds = array<i64: 32, 128>}, {transform_indices = @transform_1, window_bounds = array<i64: 32, 1>}, {transform_indices = @transform_2, window_bounds = array<i64: 32, 1>}, {transform_indices = @transform_3, window_bounds = array<i64: 1, 32, 128>}, {transform_indices = @transform_4, window_bounds = array<i64: 32, 128>}]} {
    %c0 = arith.constant 0 : index
    %c0_0 = arith.constant 0 : index
    %0 = vector.load %arg2[%c0, %c0_0] : memref<32x128xf32, #tpu.memory_space<vmem>>, vector<32x128xf32>
    %cst = arith.constant 0.000000e+00 : f32
    %1 = vector.broadcast %cst : f32 to vector<32x128xf32>
    %2 = arith.maximumf %0, %1 : vector<32x128xf32>
    %c0_1 = arith.constant 0 : index
    %c0_2 = arith.constant 0 : index
    %c0_3 = arith.constant 0 : index
    %3 = vector.load %arg5[%c0_1, %c0_2, %c0_3] : memref<1x32x128xf32, #tpu.memory_space<vmem>>, vector<1x32x128xf32>
    %4 = vector.shape_cast %3 : vector<1x32x128xf32> to vector<32x128xf32>
    %5 = vector.shape_cast %2 : vector<32x128xf32> to vector<1x32x128xf32>
    tpu.vector_store %arg5[%c0_1, %c0_2, %c0_3], %5 {strides = array<i32>} : memref<1x32x128xf32, #tpu.memory_space<vmem>>, vector<1x32x128xf32>,
    %c0_4 = arith.constant 0 : index
    %c0_5 = arith.constant 0 : index
    %6 = vector.load %arg3[%c0_4, %c0_5] : memref<32x1xf32, #tpu.memory_space<vmem>>, vector<32x1xf32>
    %7 = vector.broadcast %6 : vector<32x1xf32> to vector<32x128xf32>
    %8 = arith.mulf %2, %7 : vector<32x128xf32>
    %c0_6 = arith.constant 0 : index
    %c0_7 = arith.constant 0 : index
    %9 = vector.load %arg4[%c0_6, %c0_7] : memref<32x1xf32, #tpu.memory_space<vmem>>, vector<32x1xf32>
    %10 = vector.broadcast %9 : vector<32x1xf32> to vector<32x128xf32>
    %11 = arith.addf %8, %10 : vector<32x128xf32>
    %c0_8 = arith.constant 0 : index
    %c0_9 = arith.constant 0 : index
    %12 = vector.load %arg6[%c0_8, %c0_9] : memref<32x128xf32, #tpu.memory_space<vmem>>, vector<32x128xf32>
    tpu.vector_store %arg6[%c0_8, %c0_9], %11 {strides = array<i32>} : memref<32x128xf32, #tpu.memory_space<vmem>>, vector<32x128xf32>,
    return
  }
  func.func @transform_0(%arg0: i32, %arg1: i32) -> (i32, i32) {
    %c0_i32 = arith.constant 0 : i32
    %c0_i32_0 = arith.constant 0 : i32
    return %arg0, %c0_i32 : i32, i32
  }
  func.func @transform_1(%arg0: i32, %arg1: i32) -> (i32, i32) {
    %c0_i32 = arith.constant 0 : i32
    %c0_i32_0 = arith.constant 0 : i32
    return %arg0, %c0_i32 : i32, i32
  }
  func.func @transform_2(%arg0: i32, %arg1: i32) -> (i32, i32) {
    %c0_i32 = arith.constant 0 : i32
    %c0_i32_0 = arith.constant 0 : i32
    return %arg0, %c0_i32 : i32, i32
  }
  func.func @transform_3(%arg0: i32, %arg1: i32) -> (i32, i32, i32) {
    %c0_i32 = arith.constant 0 : i32
    %c0_i32_0 = arith.constant 0 : i32
    return %arg1, %arg0, %c0_i32 : i32, i32, i32
  }
  func.func @transform_4(%arg0: i32, %arg1: i32) -> (i32, i32) {
    %c0_i32 = arith.constant 0 : i32
    %c0_i32_0 = arith.constant 0 : i32
    return %arg0, %c0_i32 : i32, i32
  }
}

</mosaic_0001>

<llo_original>
// kernel: tpu_custom_call.1
$region0: #{tpu_custom_call.1}
  #allocation0 [shape = 'u32[]', space=smem, size = 0x4, offset = 0x4, fixed_abs, tag = 'smem constant byte address 0x4 - core index']
  #allocation1 [shape = 'u32[144,128]{1,0:T(1,128)}', space=vmem, size = 0x12000, scoped, tag = 'internal scratch']
  %s0 = inlined_call_operand.vmem [shape: f32[64,128], index: 0, kind: input, shape index: {}]
  %s1 = inlined_call_operand.vmem [shape: f32[64,1], index: 1, kind: input, shape index: {}]
  %s2 = inlined_call_operand.vmem [shape: f32[64,1], index: 2, kind: input, shape index: {}]
  %s3 = inlined_call_operand.hbm [shape: f32[4,64,128], index: 3, kind: output, shape index: {0}]
  %s4 = inlined_call_operand.hbm [shape: f32[64,128], index: 4, kind: output, shape index: {1}]
  %5 = xla_tuple %s3, %s4
  %s6 = sld [smem:[#allocation0]]
  $region53: #{tpu_custom_call.1} parent=0
    _
  %s8 = ssub.s32 1, %s6
  %s9 = scalar_select 0, %s8, %s6
  $region1: #{tpu_custom_call.1} parent=0
    #allocation2 [shape = 'u8[32768]{0}', space=vmem, size = 0x8000, scoped, tag = 'output window, operand 0']
    #allocation3 [shape = 's32[2]{0}', space=sflag, size = 0x8, scoped, tag = 'scoped memory for tpu_custom_call.1']
    #allocation4 [shape = 'u8[32768]{0}', space=vmem, size = 0x8000, scoped, tag = 'output window, operand 1']
    #allocation5 [shape = 's32[2]{0}', space=sflag, size = 0x8, scoped, tag = 'scoped memory for tpu_custom_call.1']
    %10 = vsyncpa [#allocation3], 0
    %s11 = scalar_lea.sflag [#allocation3], 1
    %12 = vsyncpa %s11, 0
    %13 = vsyncpa [#allocation5], 0
    %s14 = scalar_lea.sflag [#allocation5], 1
    %15 = vsyncpa %s14, 0
    loop: start=0, step=1, limit=10
    $region2: #{tpu_custom_call.1} parent=1 // loop_pre_header
      _
    $region3: #{tpu_custom_call.1} parent=1 // loop_header
      %s17 = sphi 0, %s21
      %p18 = scmp.ge.s32.totalorder %s17, 10
      %s24 = sphi 0, %s36
      %s25 = sphi 0, %s32
      %s26 = sphi 0, %s24
      %s27 = sphi 0, %s25
      %s28 = sphi 0, %s26
      %s29 = sphi 0, %s27
      %s39 = sphi 0, %s41
      %s42 = sphi 0, %s39
      %s43 = sphi 0, %s42
      %s59 = sphi 0, %s43
      %s65 = sphi 0, %s67
      %s68 = sphi 0, %s65
      %s69 = sphi 0, %s68
      %s85 = sphi 0, %s69
      %s91 = sphi 0, %s93
      %s94 = sphi 0, %s91
      %s95 = sphi 0, %s94
      %s111 = sphi 0, %s95
      %s119 = sphi 0, %s121
      %s122 = sphi 0, %s119
      %s123 = sphi 0, %s122
      %s139 = sphi 0, %s123
      %s145 = sphi 0, %s147
      %s148 = sphi 0, %s145
      %s149 = sphi 0, %s148
      %s165 = sphi 0, %s149
    $region4: #{tpu_custom_call.1} parent=1 // loop_header_branch
      %20 = sbr.rel (%p18) target = $region8
    $region5: #{tpu_custom_call.1} parent=1 // loop_body
      %s22 = ssub.s32 %s17, 1
      %s23 = ssub.s32 %s17, 2
      %s30 = sadd.s32 1, %s25
      %p31 = scmp.ge.s32.totalorder %s30, 4
      %s32 = scalar_select %p31, 0, %s30
      %s33 = sadd.s32 1, %s24
      %s34 = scalar_select %p31, %s33, %s24
      %p35 = scmp.ge.s32.totalorder %s34, 2
      %s36 = scalar_select %p35, 0, %s34
      %s37 = ssub.s32 %s24, %s36
      %p38 = scmp.eq.s32.totalorder %s37, 0
      %s40 = sadd.s32 %s39, 1
      %s41 = scalar_select %p38, %s39, %s40
      %p44 = pneg %p38
      %p45 = scmp.eq.s32.totalorder %s17, 7
      %p46 = por %p44, %p45
      %p47 = scmp.ne.s32.totalorder %s39, %s42
      %p48 = scmp.eq.s32.totalorder %s17, 0
      %p49 = por %p47, %p48
      %p50 = scmp.ne.s32.totalorder %s39, %s42
      %p51 = scmp.eq.s32.totalorder %s22, 7
      %p52 = por %p50, %p51
      %p53 = scmp.ne.s32.totalorder %s42, %s43
      %p54 = scmp.eq.s32.totalorder %s22, 0
      %p55 = por %p53, %p54
      %p56 = scmp.ne.s32.totalorder %s42, %s43
      %p57 = scmp.eq.s32.totalorder %s23, 7
      %p58 = por %p56, %p57
      %p60 = scmp.ne.s32.totalorder %s43, %s59
      %p61 = scmp.eq.s32.totalorder %s23, 0
      %p62 = por %p60, %p61
      %s63 = ssub.s32 %s24, %s36
      %p64 = scmp.eq.s32.totalorder %s63, 0
      %s66 = sadd.s32 %s65, 1
      %s67 = scalar_select %p64, %s65, %s66
      %p70 = pneg %p64
      %p71 = scmp.eq.s32.totalorder %s17, 7
      %p72 = por %p70, %p71
      %p73 = scmp.ne.s32.totalorder %s65, %s68
      %p74 = scmp.eq.s32.totalorder %s17, 0
      %p75 = por %p73, %p74
      %p76 = scmp.ne.s32.totalorder %s65, %s68
      %p77 = scmp.eq.s32.totalorder %s22, 7
      %p78 = por %p76, %p77
      %p79 = scmp.ne.s32.totalorder %s68, %s69
      %p80 = scmp.eq.s32.totalorder %s22, 0
      %p81 = por %p79, %p80
      %p82 = scmp.ne.s32.totalorder %s68, %s69
      %p83 = scmp.eq.s32.totalorder %s23, 7
      %p84 = por %p82, %p83
      %p86 = scmp.ne.s32.totalorder %s69, %s85
      %p87 = scmp.eq.s32.totalorder %s23, 0
      %p88 = por %p86, %p87
      %s89 = ssub.s32 %s24, %s36
      %p90 = scmp.eq.s32.totalorder %s89, 0
      %s92 = sadd.s32 %s91, 1
      %s93 = scalar_select %p90, %s91, %s92
      %p96 = pneg %p90
      %p97 = scmp.eq.s32.totalorder %s17, 7
      %p98 = por %p96, %p97
      %p99 = scmp.ne.s32.totalorder %s91, %s94
      %p100 = scmp.eq.s32.totalorder %s17, 0
      %p101 = por %p99, %p100
      %p102 = scmp.ne.s32.totalorder %s91, %s94
      %p103 = scmp.eq.s32.totalorder %s22, 7
      %p104 = por %p102, %p103
      %p105 = scmp.ne.s32.totalorder %s94, %s95
      %p106 = scmp.eq.s32.totalorder %s22, 0
      %p107 = por %p105, %p106
      %p108 = scmp.ne.s32.totalorder %s94, %s95
      %p109 = scmp.eq.s32.totalorder %s23, 7
      %p110 = por %p108, %p109
      %p112 = scmp.ne.s32.totalorder %s95, %s111
      %p113 = scmp.eq.s32.totalorder %s23, 0
      %p114 = por %p112, %p113
      %s115 = ssub.s32 %s25, %s32
      %s116 = ssub.s32 %s24, %s36
      %s117 = sor.u32 %s115, %s116
      %p118 = scmp.eq.s32.totalorder %s117, 0
      %s120 = sadd.s32 %s119, 1
      %s121 = scalar_select %p118, %s119, %s120
      %p124 = pneg %p118
      %p125 = scmp.eq.s32.totalorder %s17, 7
      %p126 = por %p124, %p125
      %p127 = scmp.ne.s32.totalorder %s119, %s122
      %p128 = scmp.eq.s32.totalorder %s17, 0
      %p129 = por %p127, %p128
      %p130 = scmp.ne.s32.totalorder %s119, %s122
      %p131 = scmp.eq.s32.totalorder %s22, 7
      %p132 = por %p130, %p131
      %p133 = scmp.ne.s32.totalorder %s122, %s123
      %p134 = scmp.eq.s32.totalorder %s22, 0
      %p135 = por %p133, %p134
      %p136 = scmp.ne.s32.totalorder %s122, %s123
      %p137 = scmp.eq.s32.totalorder %s23, 7
      %p138 = por %p136, %p137
      %p140 = scmp.ne.s32.totalorder %s123, %s139
      %p141 = scmp.eq.s32.totalorder %s23, 0
      %p142 = por %p140, %p141
      %s143 = ssub.s32 %s24, %s36
      %p144 = scmp.eq.s32.totalorder %s143, 0
      %s146 = sadd.s32 %s145, 1
      %s147 = scalar_select %p144, %s145, %s146
      %p150 = pneg %p144
      %p151 = scmp.eq.s32.totalorder %s17, 7
      %p152 = por %p150, %p151
      %p153 = scmp.ne.s32.totalorder %s145, %s148
      %p154 = scmp.eq.s32.totalorder %s17, 0
      %p155 = por %p153, %p154
      %p156 = scmp.ne.s32.totalorder %s145, %s148
      %p157 = scmp.eq.s32.totalorder %s22, 7
      %p158 = por %p156, %p157
      %p159 = scmp.ne.s32.totalorder %s148, %s149
      %p160 = scmp.eq.s32.totalorder %s22, 0
      %p161 = por %p159, %p160
      %p162 = scmp.ne.s32.totalorder %s148, %s149
      %p163 = scmp.eq.s32.totalorder %s23, 7
      %p164 = por %p162, %p163
      %p166 = scmp.ne.s32.totalorder %s149, %s165
      %p167 = scmp.eq.s32.totalorder %s23, 0
      %p168 = por %p166, %p167
      %p169 = scmp.le.s32.totalorder 1, %s17
      %p170 = scmp.lt.s32.totalorder %s17, 9
      %p171 = pnand %p169, %p170
      %p172 = pneg %p171
      // Predicated region
      $region9: #{tpu_custom_call.1} parent=5 // pred_check
        _
      $region10: #{tpu_custom_call.1} parent=5 // pred_check_branch
        %174 = sbr.rel (%p171) target = $region12
      $region11: #{tpu_custom_call.1} parent=5 // pred_region
        %s175 = ssub.s32 %s17, 1
      $region12: #{tpu_custom_call.1} parent=5 // pred_fallthru
        _
      %p176 = scmp.lt.s32.totalorder %s17, 8
      // Predicated region
      $region13: #{tpu_custom_call.1} parent=5 // pred_check
        %p177 = pneg %p176
      $region14: #{tpu_custom_call.1} parent=5 // pred_check_branch
        %179 = sbr.rel (%p177) target = $region16
      $region15: #{tpu_custom_call.1} parent=5 // pred_region
        // Predicated region
        $region17: #{tpu_custom_call.1} parent=15 // pred_check
          %p180 = pneg %p49
        $region18: #{tpu_custom_call.1} parent=15 // pred_check_branch
          %182 = sbr.rel (%p180) target = $region20
        $region19: #{tpu_custom_call.1} parent=15 // pred_region
          %s183 = smul.u32 4, %s24
          %p184 = scmp.lt.s32.totalorder %s183, 7
          %s185 = scalar_select %p184, %s183, 7
          %s186 = smul.addr %s185, 8
          %s187 = scalar_lea.vmem %s0, %s186
          %s188 = smul.u32 4, %s24
        $region20: #{tpu_custom_call.1} parent=15 // pred_fallthru
          _
        // Predicated region
        $region21: #{tpu_custom_call.1} parent=15 // pred_check
          %p189 = pneg %p75
        $region22: #{tpu_custom_call.1} parent=15 // pred_check_branch
          %191 = sbr.rel (%p189) target = $region24
        $region23: #{tpu_custom_call.1} parent=15 // pred_region
          %s192 = smul.u32 4, %s24
          %p193 = scmp.lt.s32.totalorder %s192, 7
          %s194 = scalar_select %p193, %s192, 7
          %s195 = smul.addr %s194, 8
          %s196 = scalar_lea.vmem %s1, %s195
          %s197 = smul.u32 4, %s24
        $region24: #{tpu_custom_call.1} parent=15 // pred_fallthru
          _
        // Predicated region
        $region25: #{tpu_custom_call.1} parent=15 // pred_check
          %p198 = pneg %p101
        $region26: #{tpu_custom_call.1} parent=15 // pred_check_branch
          %200 = sbr.rel (%p198) target = $region28
        $region27: #{tpu_custom_call.1} parent=15 // pred_region
          %s201 = smul.u32 4, %s24
          %p202 = scmp.lt.s32.totalorder %s201, 7
          %s203 = scalar_select %p202, %s201, 7
          %s204 = smul.addr %s203, 8
          %s205 = scalar_lea.vmem %s2, %s204
          %s206 = smul.u32 4, %s24
        $region28: #{tpu_custom_call.1} parent=15 // pred_fallthru
          _
      $region16: #{tpu_custom_call.1} parent=5 // pred_fallthru
        _
      %p207 = scmp.le.s32.totalorder 1, %s17
      %p208 = scmp.lt.s32.totalorder %s17, 9
      %p209 = pnand %p207, %p208
      %p210 = pneg %p209
      // Predicated region
      $region29: #{tpu_custom_call.1} parent=5 // pred_check
        _
      $region30: #{tpu_custom_call.1} parent=5 // pred_check_branch
        %212 = sbr.rel (%p209) target = $region32
      $region31: #{tpu_custom_call.1} parent=5 // pred_region
        %s213 = ssub.s32 %s17, 1
        %s214 = smul.u32 4, %s26
        %p215 = scmp.lt.s32.totalorder %s214, 7
        %s216 = scalar_select %p215, %s214, 7
        %s217 = smul.addr %s216, 8
        %s218 = scalar_lea.vmem %s0, %s217
        %p219 = pneg %p55
        %p220 = pneg %p52
        %s221 = smul.u32 4, %s26
        %p222 = scmp.lt.s32.totalorder %s221, 7
        %s223 = scalar_select %p222, %s221, 7
        %s224 = smul.addr %s223, 8
        %s225 = scalar_lea.vmem %s1, %s224
        %p226 = pneg %p81
        %p227 = pneg %p78
        %s228 = smul.u32 4, %s26
        %p229 = scmp.lt.s32.totalorder %s228, 7
        %s230 = scalar_select %p229, %s228, 7
        %s231 = smul.addr %s230, 8
        %s232 = scalar_lea.vmem %s2, %s231
        %p233 = pneg %p107
        %p234 = pneg %p104
        %p235 = pneg %p135
        %p236 = pneg %p132
        %s237 = sand.u32 %s122, 1
        %s238 = scalar_lea.sflag [#allocation3], %s237
        %s239 = sand.u32 %s122, 1
        %s240 = smul.addr %s239, 32
        %s241 = scalar_lea.vmem [#allocation2], %s240
        %p242 = pneg %p161
        %p243 = pneg %p158
        %s244 = sand.u32 %s148, 1
        %s245 = scalar_lea.sflag [#allocation5], %s244
        %s246 = sand.u32 %s148, 1
        %s247 = smul.addr %s246, 32
        %s248 = scalar_lea.vmem [#allocation4], %s247
        %s249 = smul.u32 4, %s26
        %p250 = scmp.lt.s32.totalorder %s249, 7
        %s251 = scalar_select %p250, %s249, 7
        %s252 = smul.addr %s251, 8
        %s253 = scalar_lea.vmem %s0, %s252
        %s254 = smul.u32 4, %s26
        %s255 = smul.u32 4, %s26
        %p256 = scmp.lt.s32.totalorder %s255, 7
        %s257 = scalar_select %p256, %s255, 7
        %s258 = smul.addr %s257, 8
        %s259 = scalar_lea.vmem %s1, %s258
        %s260 = smul.u32 4, %s26
        %s261 = smul.u32 4, %s26
        %p262 = scmp.lt.s32.totalorder %s261, 7
        %s263 = scalar_select %p262, %s261, 7
        %s264 = smul.addr %s263, 8
        %s265 = scalar_lea.vmem %s2, %s264
        %s266 = smul.u32 4, %s26
        %s267 = smul.u32 4, %s26
        %s268 = smul.u32 4, %s26
        %v269 = vld [vmem:[%s253] sm:$0xff]
        %v270 = vld [vmem:[%s253 + $0x8] sm:$0xff]
        %v271 = vld [vmem:[%s253 + $0x10] sm:$0xff]
        %v272 = vld [vmem:[%s253 + $0x18] sm:$0xff]
        %v273 = vmax.f32 %v269, 0.0
        %v274 = vmax.f32 %v270, 0.0
        %v275 = vmax.f32 %v271, 0.0
        %v276 = vmax.f32 %v272, 0.0
        %277 = vst [vmem:[%s241] sm:$0xff] %v273
        %278 = vst [vmem:[%s241 + $0x8] sm:$0xff] %v274
        %279 = vst [vmem:[%s241 + $0x10] sm:$0xff] %v275
        %280 = vst [vmem:[%s241 + $0x18] sm:$0xff] %v276
        %v281 = vld [vmem:[%s259] sm:$0xff]
        %v282 = vld [vmem:[%s259 + $0x8] sm:$0xff]
        %v283 = vld [vmem:[%s259 + $0x10] sm:$0xff]
        %v284 = vld [vmem:[%s259 + $0x18] sm:$0xff]
        %286 = vset.pattern.permute.xlu0 0
        %287 = vperm.xlu0 %286, %v281
        %v288 = vpop.permute.xlu0 %287
        %291 = vset.pattern.permute.xlu0 0
        %292 = vperm.xlu0 %291, %v282
        %v293 = vpop.permute.xlu0 %292
        %296 = vset.pattern.permute.xlu0 0
        %297 = vperm.xlu0 %296, %v283
        %v298 = vpop.permute.xlu0 %297
        %301 = vset.pattern.permute.xlu0 0
        %302 = vperm.xlu0 %301, %v284
        %v303 = vpop.permute.xlu0 %302
        %v305 = vmul.f32 %v273, %v288
        %v306 = vmul.f32 %v274, %v293
        %v307 = vmul.f32 %v275, %v298
        %v308 = vmul.f32 %v276, %v303
        %v309 = vld [vmem:[%s265] sm:$0xff]
        %v310 = vld [vmem:[%s265 + $0x8] sm:$0xff]
        %v311 = vld [vmem:[%s265 + $0x10] sm:$0xff]
        %v312 = vld [vmem:[%s265 + $0x18] sm:$0xff]
        %314 = vset.pattern.permute.xlu0 0
        %315 = vperm.xlu0 %314, %v309
        %v316 = vpop.permute.xlu0 %315
        %319 = vset.pattern.permute.xlu0 0
        %320 = vperm.xlu0 %319, %v310
        %v321 = vpop.permute.xlu0 %320
        %324 = vset.pattern.permute.xlu0 0
        %325 = vperm.xlu0 %324, %v311
        %v326 = vpop.permute.xlu0 %325
        %329 = vset.pattern.permute.xlu0 0
        %330 = vperm.xlu0 %329, %v312
        %v331 = vpop.permute.xlu0 %330
        %v333 = vadd.f32 %v305, %v316
        %v334 = vadd.f32 %v306, %v321
        %v335 = vadd.f32 %v307, %v326
        %v336 = vadd.f32 %v308, %v331
        %337 = vst [vmem:[%s248] sm:$0xff] %v333
        %338 = vst [vmem:[%s248 + $0x8] sm:$0xff] %v334
        %339 = vst [vmem:[%s248 + $0x10] sm:$0xff] %v335
        %340 = vst [vmem:[%s248 + $0x18] sm:$0xff] %v336
        %s341 = sand.u32 %s122, 1
        %s342 = scalar_lea.sflag [#allocation3], %s341
        %s343 = sand.u32 %s122, 1
        %s344 = smul.addr %s343, 32
        %s345 = scalar_lea.vmem [#allocation2], %s344
        %s346 = sand.u32 %s148, 1
        %s347 = scalar_lea.sflag [#allocation5], %s346
        %s348 = sand.u32 %s148, 1
        %s349 = smul.addr %s348, 32
        %s350 = scalar_lea.vmem [#allocation4], %s349
        // Predicated region
        $region33: #{tpu_custom_call.1} parent=31 // pred_check
          %p351 = pneg %p132
        $region34: #{tpu_custom_call.1} parent=31 // pred_check_branch
          %353 = sbr.rel (%p351) target = $region36
        $region35: #{tpu_custom_call.1} parent=31 // pred_region
          %s354 = smul.u32 4, %s26
          %s356 = ssub.s32 512, 512
          %357 = vsyncadd %s342, %s356
          %s358 = smul.addr %s27, 8
          %s359 = sadd.s32 %s354, %s358
          %s360 = smul.addr %s359, 128
          %s361 = scalar_lea.hbm %s3, %s360
          %s362 = sshll.u32 %s345, 4
          %s363 = int_to_ptr.vmem [resolvable:$true] %s362
          %368 = dma.vmem_to_hbm [thread:$0]  %s363, 512, %s361, %s342, 128, 128, 8
        $region36: #{tpu_custom_call.1} parent=31 // pred_fallthru
          _
        // Predicated region
        $region37: #{tpu_custom_call.1} parent=31 // pred_check
          %p369 = pneg %p158
        $region38: #{tpu_custom_call.1} parent=31 // pred_check_branch
          %371 = sbr.rel (%p369) target = $region40
        $region39: #{tpu_custom_call.1} parent=31 // pred_region
          %s372 = smul.u32 4, %s26
          %s374 = ssub.s32 512, 512
          %375 = vsyncadd %s347, %s374
          %s376 = smul.addr %s372, 128
          %s377 = scalar_lea.hbm %s4, %s376
          %s378 = sshll.u32 %s350, 4
          %s379 = int_to_ptr.vmem [resolvable:$true] %s378
          %384 = dma.vmem_to_hbm [thread:$0]  %s379, 512, %s377, %s347, 128, 128, 8
        $region40: #{tpu_custom_call.1} parent=31 // pred_fallthru
          _
      $region32: #{tpu_custom_call.1} parent=5 // pred_fallthru
        _
      %p385 = scmp.le.s32.totalorder 2, %s17
      // Predicated region
      $region41: #{tpu_custom_call.1} parent=5 // pred_check
        %p386 = pneg %p385
      $region42: #{tpu_custom_call.1} parent=5 // pred_check_branch
        %388 = sbr.rel (%p386) target = $region44
      $region43: #{tpu_custom_call.1} parent=5 // pred_region
        %s389 = ssub.s32 %s17, 2
        // Predicated region
        $region45: #{tpu_custom_call.1} parent=43 // pred_check
          %p390 = pneg %p138
        $region46: #{tpu_custom_call.1} parent=43 // pred_check_branch
          %392 = sbr.rel (%p390) target = $region48
        $region47: #{tpu_custom_call.1} parent=43 // pred_region
          %s393 = sand.u32 %s123, 1
          %s394 = scalar_lea.sflag [#allocation3], %s393
          %s395 = sand.u32 %s123, 1
          %s396 = smul.addr %s395, 32
          %s397 = scalar_lea.vmem [#allocation2], %s396
          %398 = dma.done %s394, 512
        $region48: #{tpu_custom_call.1} parent=43 // pred_fallthru
          _
        // Predicated region
        $region49: #{tpu_custom_call.1} parent=43 // pred_check
          %p399 = pneg %p164
        $region50: #{tpu_custom_call.1} parent=43 // pred_check_branch
          %401 = sbr.rel (%p399) target = $region52
        $region51: #{tpu_custom_call.1} parent=43 // pred_region
          %s402 = sand.u32 %s149, 1
          %s403 = scalar_lea.sflag [#allocation5], %s402
          %s404 = sand.u32 %s149, 1
          %s405 = smul.addr %s404, 32
          %s406 = scalar_lea.vmem [#allocation4], %s405
          %407 = dma.done %s403, 512
        $region52: #{tpu_custom_call.1} parent=43 // pred_fallthru
          _
      $region44: #{tpu_custom_call.1} parent=5 // pred_fallthru
        _
    $region6: #{tpu_custom_call.1} parent=1 // loop_footer
      %s21 = sadd.s32 1, %s17
    $region7: #{tpu_custom_call.1} parent=1 // loop_footer_branch
      %16 = sbr.rel target = $region3
    $region8: #{tpu_custom_call.1} parent=1 // loop_exit
      _
    %408 = vsyncpa [#allocation3], 1
    %s409 = scalar_lea.sflag [#allocation3], 1
    %410 = vsyncpa %s409, 1
    %411 = vsyncpa [#allocation5], 1
    %s412 = scalar_lea.sflag [#allocation5], 1
    %413 = vsyncpa %s412, 1

</llo_original>
